<compile_context>
chip_gen: v6e
topology: v6e:2x2x1
jax: 0.10.0
libtpu: 0.0.40
codegen_flags: <defaults>
</compile_context>

<pallas_src>
import functools

import jax
import jax.numpy as jnp
from jax.experimental import pallas as pl
from jax.experimental.pallas import tpu as pltpu


def _round_up(a: int, b: int) -> int:
    return (a + b - 1) // b * b


def _pick_tff(d_ff_p: int, target: int) -> int:
    """Largest multiple of 128 that is <= target and divides d_ff_p."""
    target = max(128, min(target, d_ff_p))
    cand = (target // 128) * 128
    while cand > 128 and d_ff_p % cand != 0:
        cand -= 128
    return max(128, cand)


def _th_for(tff: int) -> int:
    """In-kernel hidden sub-slab width (multiple of 128, divides tff)."""
    return 256 if (tff % 256 == 0 and tff >= 256) else 128


def _tpu_vmem_budget() -> int:
    """~75% of physical VMEM, leaving headroom for compiler-internal scratch."""
    vmem_phys = None
    try:
        vmem_phys = int(pltpu.get_tpu_info().vmem_capacity_bytes)
    except Exception:
        vmem_phys = None
    if not vmem_phys:
        try:
            kind = jax.devices()[0].device_kind.lower()
        except Exception:
            kind = ""
        vmem_phys = (64 << 20) if "v7" in kind else (128 << 20)
    return (vmem_phys * 3) // 4


def _vmem_bytes(tm, tff, th, d_model_p, cd_bytes, out_bytes, wbuf):
    """Per-step VMEM footprint (buffer counts already included, no 2x fudge)."""
    return (2 * tm * d_model_p * cd_bytes          # x row tile (double buffered)
            + wbuf * d_model_p * tff * cd_bytes    # W1 slab(s)
            + wbuf * tff * 4                       # b1 slab(s), f32
            + wbuf * tff * d_model_p * cd_bytes    # W2 slab(s)
            + 2 * d_model_p * 4                    # b2 (resident)
            + 2 * tm * d_model_p * out_bytes       # out tile (double buffered)
            + tm * d_model_p * 4                   # f32 accumulator scratch
            + tm * th * 4                          # f32 hidden sub-slab
            + tm * th * cd_bytes)                  # hidden sub-slab cast for dot2


def _pff_kernel(x_ref, w1_ref, b1_ref, w2_ref, b2_ref, o_ref, acc_ref,
                *, th, n_sub):
    # x_ref : (tm, d_model_p)   input row tile (same block across the d_ff axis)
    # w1_ref: (d_model_p, tff)  column slab of W1 (whole W1 when resident)
    # b1_ref: (1, tff)          f32 bias slice for this slab
    # w2_ref: (tff, d_model_p)  row slab of W2
    # b2_ref: (1, d_model_p)    f32 output bias (resident)
    # o_ref : (tm, d_model_p)   output tile (written once, at the last k step)
    # acc_ref:(tm, d_model_p)   f32 accumulator scratch (persists across k)
    kff = pl.program_id(1)

    @pl.when(kff == 0)
    def _init():
        acc_ref[...] = jnp.zeros_like(acc_ref)

    # Sub-tile the hidden dimension: never materialize the full (tm, tff) f32
    # intermediate. Static slices -> zero-cost views, MXU f32 accumulation.
    for c in range(n_sub):
        lo = c * th
        h = jnp.dot(x_ref[...], w1_ref[:, lo:lo + th],
                    preferred_element_type=jnp.float32)
        h = jnp.maximum(h + b1_ref[:, lo:lo + th], 0.0)
        acc_ref[...] += jnp.dot(h.astype(w2_ref.dtype), w2_ref[lo:lo + th, :],
                                preferred_element_type=jnp.float32)

    @pl.when(kff == pl.num_programs(1) - 1)
    def _finalize():
        o_ref[...] = (acc_ref[...] + b2_ref[...]).astype(o_ref.dtype)


def prepare_ffn_params(w1, b1, w2, b2, *, compute_dtype=jnp.bfloat16):
    """One-time weight prep, hoisted out of the per-call forward path.

    Casts W1/W2 to the MXU operand dtype, keeps biases in f32, and zero-pads
    everything to lane-aligned (multiple-of-128) shapes.
    """
    d_model, d_ff = w1.shape
    assert w2.shape == (d_ff, d_model), (w1.shape, w2.shape)
    d_model_p = _round_up(d_model, 128)
    d_ff_p = _round_up(d_ff, 128)
    w1c = jnp.pad(w1.astype(compute_dtype),
                  ((0, d_model_p - d_model), (0, d_ff_p - d_ff)))
    w2c = jnp.pad(w2.astype(compute_dtype),
                  ((0, d_ff_p - d_ff), (0, d_model_p - d_model)))
    b1f = jnp.pad(b1.astype(jnp.float32).reshape(1, d_ff),
                  ((0, 0), (0, d_ff_p - d_ff)))
    b2f = jnp.pad(b2.astype(jnp.float32).reshape(1, d_model),
                  ((0, 0), (0, d_model_p - d_model)))
    return dict(w1=w1c, b1=b1f, w2=w2c, b2=b2f,
                d_model=d_model, d_ff=d_ff,
                d_model_p=d_model_p, d_ff_p=d_ff_p,
                compute_dtype=jnp.dtype(compute_dtype))


def positionwise_feed_forward(x, params, *, tm=None, tff=None,
                              out_dtype=None, weight_buffers=2):
    """x: (B, K, d_model) -> (B, K, d_model).  relu(x@W1+b1)@W2+b2."""
    B, K, d_model = x.shape
    assert d_model == params["d_model"]
    d_model_p = params["d_model_p"]
    d_ff_p = params["d_ff_p"]
    compute_dtype = params["compute_dtype"]
    out_dtype = jnp.dtype(out_dtype) if out_dtype is not None else x.dtype
    cd_bytes = jnp.dtype(compute_dtype).itemsize
    out_bytes = jnp.dtype(out_dtype).itemsize
    M = B * K

    budget = _tpu_vmem_budget()

    # ---- row tile -------------------------------------------------------------
    user_tm = tm is not None
    if user_tm:
        tm = max(16, _round_up(tm, 16))
        tm = min(tm, _round_up(M, 16))
    else:
        tm_target = 512 if budget >= (72 << 20) else 256   # v5e/v6e vs v7x
        tm = min(tm_target, _round_up(M, 16))
        if tm >= M and M >= 256:
            # keep >= 2 steps on the 'parallel' axis so megacore parts (v7x)
            # can shard the row-tile loop across both TensorCores
            tm = max(128, _round_up((M + 1) // 2, 16))
    Mp = _round_up(M, tm)

    # ---- d_ff slab: weights-resident fast path first, else stream ------------
    user_tff = tff is not None
    if user_tff:
        tff = _pick_tff(d_ff_p, _round_up(max(tff, 128), 128))
    else:
        tff = d_ff_p                    # try weights-resident (fetched once)
        while True:
            th_try = min(_th_for(tff), tff)
            if _vmem_bytes(tm, tff, th_try, d_model_p,
                           cd_bytes, out_bytes, 2) <= budget:
                break
            if tff > 512:
                tff = _pick_tff(d_ff_p, 512)
            elif tff > 128:
                tff = _pick_tff(d_ff_p, tff - 128)
            elif not user_tm and tm > 128:
                tm = max(128, tm // 2)
                Mp = _round_up(M, tm)
            else:
                break

    th = min(_th_for(tff), tff)
    n_sub = tff // th
    n_k = d_ff_p // tff                 # 1 -> weights-resident fast path

    # ---- VMEM limit: actual footprint, clamped to the per-gen budget ---------
    wbuf = max(2, int(weight_buffers)) if n_k > 1 else 2
    est = _vmem_bytes(tm, tff, th, d_model_p, cd_bytes, out_bytes, wbuf)
    vmem_limit = int(min(budget, max(int(est * 1.25), 32 << 20)))

    # ---- activation prep (weights already prepped once, outside this call) ---
    x2d = x.reshape(M, d_model).astype(compute_dtype)
    if Mp != M or d_model_p != d_model:
        x2d = jnp.pad(x2d, ((0, Mp - M), (0, d_model_p - d_model)))

    w_kwargs = {}
    if n_k > 1 and int(weight_buffers) != 2:
        # deeper buffering on the streamed weight slabs to hide DMA latency
        w_kwargs["pipeline_mode"] = pl.Buffered(int(weight_buffers))

    grid = (Mp // tm, n_k)              # reduction (d_ff) axis last
    kernel = functools.partial(_pff_kernel, th=th, n_sub=n_sub)

    out2d = pl.pallas_call(
        kernel,
        out_shape=jax.ShapeDtypeStruct((Mp, d_model_p), out_dtype),
        grid_spec=pltpu.PrefetchScalarGridSpec(
            num_scalar_prefetch=0,
            grid=grid,
            in_specs=[
                pl.BlockSpec((tm, d_model_p), lambda i, k: (i, 0)),      # x rows
                pl.BlockSpec((d_model_p, tff), lambda i, k: (0, k),      # W1 slab
                             **w_kwargs),
                pl.BlockSpec((1, tff), lambda i, k: (0, k)),             # b1 slab
                pl.BlockSpec((tff, d_model_p), lambda i, k: (k, 0),      # W2 slab
                             **w_kwargs),
                pl.BlockSpec((1, d_model_p), lambda i, k: (0, 0)),       # b2
            ],
            out_specs=pl.BlockSpec((tm, d_model_p), lambda i, k: (i, 0)),
            scratch_shapes=[pltpu.VMEM((tm, d_model_p), jnp.float32)],
        ),
        compiler_params=pltpu.CompilerParams(
            dimension_semantics=("parallel", "arbitrary"),
            vmem_limit_bytes=vmem_limit,
        ),
    )(x2d, params["w1"], params["b1"], params["w2"], params["b2"])

    return out2d[:M, :d_model].reshape(B, K, d_model)


def ffn_forward(x, w1, b1, w2, b2, *, compute_dtype=jnp.bfloat16, **kw):
    """Convenience one-shot API (prep + forward). Prefer prepare_ffn_params
    once + positionwise_feed_forward per call in real use."""
    params = prepare_ffn_params(w1, b1, w2, b2, compute_dtype=compute_dtype)
    return positionwise_feed_forward(x, params, **kw)


def init_params(key, d_model, d_ff, dtype=jnp.float32):
    """Deterministic init mimicking nn.Linear's uniform(-1/sqrt(fan_in), +)."""
    k1, k2, k3, k4 = jax.random.split(key, 4)
    bound1 = 1.0 / jnp.sqrt(d_model)
    bound2 = 1.0 / jnp.sqrt(d_ff)
    # stored (in_dim, out_dim) so the kernel computes x @ W
    w1 = jax.random.uniform(k1, (d_model, d_ff), dtype, -bound1, bound1)
    b1 = jax.random.uniform(k2, (d_ff,), dtype, -bound1, bound1)
    w2 = jax.random.uniform(k3, (d_ff, d_model), dtype, -bound2, bound2)
    b2 = jax.random.uniform(k4, (d_model,), dtype, -bound2, bound2)
    return w1, b1, w2, b2


if __name__ == "__main__":
    # Small shapes consistent with the module: (batch, K, d_model), hidden d_ff.
    # Chosen so both M (48) and d_ff (320 -> 384) need padding.
    B, K, d_model, d_ff = 2, 24, 128, 320

    key = jax.random.PRNGKey(0)
    kx, kp = jax.random.split(key)
    x = jax.random.normal(kx, (B, K, d_model), dtype=jnp.float32)
    w1, b1, w2, b2 = init_params(kp, d_model, d_ff)

    # Plain-JAX reference (same semantics as the PyTorch module).
    ref = jnp.maximum(x @ w1 + b1, 0.0) @ w2 + b2

    # 1) f32 MXU path, forced multi-step reduction grid (streaming path, tight).
    p32 = prepare_ffn_params(w1, b1, w2, b2, compute_dtype=jnp.float32)
    out_stream = positionwise_feed_forward(x, p32, tm=32, tff=128)
    out_stream = jax.block_until_ready(out_stream)
    assert out_stream.shape == (B, K, d_model)
    assert jnp.allclose(out_stream, ref, atol=5e-3, rtol=5e-3)

    # 2) f32 MXU path, auto tiling (weights-resident fast path, tight).
    out_res = positionwise_feed_forward(x, p32)
    out_res = jax.block_until_ready(out_res)
    assert out_res.shape == (B, K, d_model)
    assert jnp.allclose(out_res, ref, atol=5e-3, rtol=5e-3)

    # 3) bf16 MXU operands with f32 accumulation (production config, looser tol).
    pbf = prepare_ffn_params(w1, b1, w2, b2, compute_dtype=jnp.bfloat16)
    out_bf16 = positionwise_feed_forward(x, pbf)
    out_bf16 = jax.block_until_ready(out_bf16)
    assert out_bf16.shape == (B, K, d_model)
    assert jnp.allclose(out_bf16, ref, atol=5e-2, rtol=5e-2)

    print("KERNEL_OK")
</pallas_src>

<mosaic_0001>
module attributes {stable_mosaic.version = 11 : i64} {
  func.func @_pff_kernel(%arg0: i32, %arg1: i32, %arg2: memref<32x128xf32, #tpu.memory_space<vmem>>, %arg3: memref<128x128xf32, #tpu.memory_space<vmem>>, %arg4: memref<1x128xf32, #tpu.memory_space<vmem>>, %arg5: memref<128x128xf32, #tpu.memory_space<vmem>>, %arg6: memref<1x128xf32, #tpu.memory_space<vmem>>, %arg7: memref<32x128xf32, #tpu.memory_space<vmem>>, %arg8: memref<32x128xf32, #tpu.memory_space<vmem>>) attributes {dimension_semantics = [#tpu.dimension_semantics<parallel>, #tpu.dimension_semantics<arbitrary>], iteration_bounds = array<i64: 2, 3>, scalar_prefetch = 0 : i64, scratch_operands = 1 : i64, tpu.core_type = #tpu.core_type<tc>, window_params = [{transform_indices = @transform_0, window_bounds = array<i64: 32, 128>}, {transform_indices = @transform_1, window_bounds = array<i64: 128, 128>}, {transform_indices = @transform_2, window_bounds = array<i64: 1, 128>}, {transform_indices = @transform_3, window_bounds = array<i64: 128, 128>}, {pipeline_mode = #tpu.pipeline_mode<synchronous>, transform_indices = @transform_4, window_bounds = array<i64: 1, 128>}, {transform_indices = @transform_5, window_bounds = array<i64: 32, 128>}]} {
    %c0_i32 = arith.constant 0 : i32
    %0 = arith.cmpi eq, %arg1, %c0_i32 : i32
    %1 = arith.extui %0 : i1 to i32
    %c0_i32_0 = arith.constant 0 : i32
    %2 = arith.cmpi ne, %1, %c0_i32_0 : i32
    scf.if %2 {
      %cst_15 = arith.constant 0.000000e+00 : f32
      %19 = vector.broadcast %cst_15 : f32 to vector<32x128xf32>
      %c0_16 = arith.constant 0 : index
      %c0_17 = arith.constant 0 : index
      %20 = vector.load %arg8[%c0_16, %c0_17] : memref<32x128xf32, #tpu.memory_space<vmem>>, vector<32x128xf32>
      tpu.vector_store %arg8[%c0_16, %c0_17], %19 {strides = array<i32>} : memref<32x128xf32, #tpu.memory_space<vmem>>, vector<32x128xf32>,
    } else {
    }
    %c0 = arith.constant 0 : index
    %c0_1 = arith.constant 0 : index
    %3 = vector.load %arg2[%c0, %c0_1] : memref<32x128xf32, #tpu.memory_space<vmem>>, vector<32x128xf32>
    %c0_2 = arith.constant 0 : index
    %c0_3 = arith.constant 0 : index
    %4 = vector.load %arg3[%c0_2, %c0_3] : memref<128x128xf32, #tpu.memory_space<vmem>>, vector<128x128xf32>
    %cst = arith.constant dense<0.000000e+00> : vector<32x128xf32>
    %5 = tpu.matmul %3, %4, %cst {dimension_numbers = #tpu.dot_dimension_numbers<[1], [0], [0], [1], [0, 0, 1, 1], [], []>} : vector<32x128xf32>, vector<128x128xf32>, vector<32x128xf32> -> vector<32x128xf32>
    %c0_4 = arith.constant 0 : index
    %c0_5 = arith.constant 0 : index
    %6 = vector.load %arg4[%c0_4, %c0_5] : memref<1x128xf32, #tpu.memory_space<vmem>>, vector<1x128xf32>
    %7 = vector.broadcast %6 : vector<1x128xf32> to vector<32x128xf32>
    %8 = arith.addf %5, %7 : vector<32x128xf32>
    %cst_6 = arith.constant 0.000000e+00 : f32
    %9 = vector.broadcast %cst_6 : f32 to vector<32x128xf32>
    %10 = arith.maximumf %8, %9 : vector<32x128xf32>
    %c0_7 = arith.constant 0 : index
    %c0_8 = arith.constant 0 : index
    %11 = vector.load %arg8[%c0_7, %c0_8] : memref<32x128xf32, #tpu.memory_space<vmem>>, vector<32x128xf32>
    %c0_9 = arith.constant 0 : index
    %c0_10 = arith.constant 0 : index
    %12 = vector.load %arg5[%c0_9, %c0_10] : memref<128x128xf32, #tpu.memory_space<vmem>>, vector<128x128xf32>
    %cst_11 = arith.constant dense<0.000000e+00> : vector<32x128xf32>
    %13 = tpu.matmul %10, %12, %cst_11 {dimension_numbers = #tpu.dot_dimension_numbers<[1], [0], [0], [1], [0, 0, 1, 1], [], []>} : vector<32x128xf32>, vector<128x128xf32>, vector<32x128xf32> -> vector<32x128xf32>
    %14 = arith.addf %11, %13 : vector<32x128xf32>
    %c0_12 = arith.constant 0 : index
    %c0_13 = arith.constant 0 : index
    %15 = vector.load %arg8[%c0_12, %c0_13] : memref<32x128xf32, #tpu.memory_space<vmem>>, vector<32x128xf32>
    tpu.vector_store %arg8[%c0_12, %c0_13], %14 {strides = array<i32>} : memref<32x128xf32, #tpu.memory_space<vmem>>, vector<32x128xf32>,
    %c2_i32 = arith.constant 2 : i32
    %16 = arith.cmpi eq, %arg1, %c2_i32 : i32
    %17 = arith.extui %16 : i1 to i32
    %c0_i32_14 = arith.constant 0 : i32
    %18 = arith.cmpi ne, %17, %c0_i32_14 : i32
    scf.if %18 {
      %c0_15 = arith.constant 0 : index
      %c0_16 = arith.constant 0 : index
      %19 = vector.load %arg8[%c0_15, %c0_16] : memref<32x128xf32, #tpu.memory_space<vmem>>, vector<32x128xf32>
      %c0_17 = arith.constant 0 : index
      %c0_18 = arith.constant 0 : index
      %20 = vector.load %arg6[%c0_17, %c0_18] : memref<1x128xf32, #tpu.memory_space<vmem>>, vector<1x128xf32>
      %21 = vector.broadcast %20 : vector<1x128xf32> to vector<32x128xf32>
      %22 = arith.addf %19, %21 : vector<32x128xf32>
      %c0_19 = arith.constant 0 : index
      %c0_20 = arith.constant 0 : index
      %23 = vector.load %arg7[%c0_19, %c0_20] : memref<32x128xf32, #tpu.memory_space<vmem>>, vector<32x128xf32>
      tpu.vector_store %arg7[%c0_19, %c0_20], %22 {strides = array<i32>} : memref<32x128xf32, #tpu.memory_space<vmem>>, vector<32x128xf32>,
    } else {
    }
    return
  }
  func.func @transform_0(%arg0: i32, %arg1: i32) -> (i32, i32) {
    %c0_i32 = arith.constant 0 : i32
    %c0_i32_0 = arith.constant 0 : i32
    return %arg0, %c0_i32 : i32, i32
  }
  func.func @transform_1(%arg0: i32, %arg1: i32) -> (i32, i32) {
    %c0_i32 = arith.constant 0 : i32
    %c0_i32_0 = arith.constant 0 : i32
    return %c0_i32, %arg1 : i32, i32
  }
  func.func @transform_2(%arg0: i32, %arg1: i32) -> (i32, i32) {
    %c0_i32 = arith.constant 0 : i32
    %c0_i32_0 = arith.constant 0 : i32
    return %c0_i32, %arg1 : i32, i32
  }
  func.func @transform_3(%arg0: i32, %arg1: i32) -> (i32, i32) {
    %c0_i32 = arith.constant 0 : i32
    %c0_i32_0 = arith.constant 0 : i32
    return %arg1, %c0_i32 : i32, i32
  }
  func.func @transform_4(%arg0: i32, %arg1: i32) -> (i32, i32) {
    %c0_i32 = arith.constant 0 : i32
    %c0_i32_0 = arith.constant 0 : i32
    %c0_i32_1 = arith.constant 0 : i32
    return %c0_i32, %c0_i32_0 : i32, i32
  }
  func.func @transform_5(%arg0: i32, %arg1: i32) -> (i32, i32) {
    %c0_i32 = arith.constant 0 : i32
    %c0_i32_0 = arith.constant 0 : i32
    return %arg0, %c0_i32 : i32, i32
  }
}

</mosaic_0001>

<llo_original>
// kernel: tpu_custom_call.1
$region0: #{tpu_custom_call.1}
  #allocation0 [shape = 'u32[]', space=smem, size = 0x4, offset = 0x4, fixed_abs, tag = 'smem constant byte address 0x4 - core index']
  #allocation1 [shape = 'u32[144,128]{1,0:T(1,128)}', space=vmem, size = 0x12000, scoped, tag = 'internal scratch']
  #allocation2 [shape = 'f32[32,128]{1,0:T(8,128)}', space=vmem, size = 0x4000, scoped, tag = 'scratch operand']
  %s0 = inlined_call_operand.hbm [shape: f32[64,128], index: 0, kind: input, shape index: {}]
  %s1 = inlined_call_operand.hbm [shape: f32[128,384], index: 1, kind: input, shape index: {}]
  %s2 = inlined_call_operand.vmem [shape: f32[1,384], index: 2, kind: input, shape index: {}]
  %s3 = inlined_call_operand.hbm [shape: f32[384,128], index: 3, kind: input, shape index: {}]
  %s4 = inlined_call_operand.vmem [shape: f32[1,128], index: 4, kind: input, shape index: {}]
  %s5 = inlined_call_operand.hbm [shape: f32[64,128], index: 5, kind: output, shape index: {}]
  %s6 = sld [smem:[#allocation0]]
  $region73: #{tpu_custom_call.1} parent=0
    _
  %s8 = ssub.s32 1, %s6
  %s9 = scalar_select 0, %s8, %s6
  $region1: #{tpu_custom_call.1} parent=0
    #allocation3 [shape = 'u8[32768]{0}', space=vmem, size = 0x8000, scoped, tag = 'input window, operand 0']
    #allocation4 [shape = 's32[2]{0}', space=sflag, size = 0x8, scoped, tag = 'scoped memory for tpu_custom_call.1']
    #allocation5 [shape = 's32[2]{0}', space=sflag, size = 0x8, scoped, tag = 'scoped memory for tpu_custom_call.1']
    #allocation6 [shape = 'u8[131072]{0}', space=vmem, size = 0x20000, scoped, tag = 'input window, operand 1']
    #allocation7 [shape = 's32[2]{0}', space=sflag, size = 0x8, scoped, tag = 'scoped memory for tpu_custom_call.1']
    #allocation8 [shape = 'u8[131072]{0}', space=vmem, size = 0x20000, scoped, tag = 'input window, operand 3']
    #allocation9 [shape = 'u8[32768]{0}', space=vmem, size = 0x8000, scoped, tag = 'output window, operand 0']
    %10 = vsyncpa [#allocation4], 0
    %s11 = scalar_lea.sflag [#allocation4], 1
    %12 = vsyncpa %s11, 0
    %13 = vsyncpa [#allocation7], 0
    %s14 = scalar_lea.sflag [#allocation7], 1
    %15 = vsyncpa %s14, 0
    %16 = vsyncpa [#allocation5], 0
    %s17 = scalar_lea.sflag [#allocation5], 1
    %18 = vsyncpa %s17, 0
    loop: start=0, step=1, limit=8
    $region2: #{tpu_custom_call.1} parent=1 // loop_pre_header
      _
    $region3: #{tpu_custom_call.1} parent=1 // loop_header
      %s20 = sphi 0, %s24
      %p21 = scmp.ge.s32.totalorder %s20, 8
      %s27 = sphi 0, %s39
      %s28 = sphi 0, %s35
      %s29 = sphi 0, %s27
      %s30 = sphi 0, %s28
      %s31 = sphi 0, %s29
      %s32 = sphi 0, %s30
      %s42 = sphi 0, %s44
      %s45 = sphi 0, %s42
      %s46 = sphi 0, %s45
      %s62 = sphi 0, %s46
      %s68 = sphi 0, %s70
      %s71 = sphi 0, %s68
      %s72 = sphi 0, %s71
      %s88 = sphi 0, %s72
      %s94 = sphi 0, %s96
      %s97 = sphi 0, %s94
      %s98 = sphi 0, %s97
      %s114 = sphi 0, %s98
      %s120 = sphi 0, %s122
      %s123 = sphi 0, %s120
      %s124 = sphi 0, %s123
      %s140 = sphi 0, %s124
      %s144 = sphi 0, %s144
      %s146 = sphi 0, %s144
      %s147 = sphi 0, %s146
      %s161 = sphi 0, %s147
      %s167 = sphi 0, %s169
      %s170 = sphi 0, %s167
      %s171 = sphi 0, %s170
      %s187 = sphi 0, %s171
    $region4: #{tpu_custom_call.1} parent=1 // loop_header_branch
      %23 = sbr.rel (%p21) target = $region8
    $region5: #{tpu_custom_call.1} parent=1 // loop_body
      %s25 = ssub.s32 %s20, 1
      %s26 = ssub.s32 %s20, 2
      %s33 = sadd.s32 1, %s28
      %p34 = scmp.ge.s32.totalorder %s33, 3
      %s35 = scalar_select %p34, 0, %s33
      %s36 = sadd.s32 1, %s27
      %s37 = scalar_select %p34, %s36, %s27
      %p38 = scmp.ge.s32.totalorder %s37, 2
      %s39 = scalar_select %p38, 0, %s37
      %s40 = ssub.s32 %s27, %s39
      %p41 = scmp.eq.s32.totalorder %s40, 0
      %s43 = sadd.s32 %s42, 1
      %s44 = scalar_select %p41, %s42, %s43
      %p47 = pneg %p41
      %p48 = scmp.eq.s32.totalorder %s20, 5
      %p49 = por %p47, %p48
      %p50 = scmp.ne.s32.totalorder %s42, %s45
      %p51 = scmp.eq.s32.totalorder %s20, 0
      %p52 = por %p50, %p51
      %p53 = scmp.ne.s32.totalorder %s42, %s45
      %p54 = scmp.eq.s32.totalorder %s25, 5
      %p55 = por %p53, %p54
      %p56 = scmp.ne.s32.totalorder %s45, %s46
      %p57 = scmp.eq.s32.totalorder %s25, 0
      %p58 = por %p56, %p57
      %p59 = scmp.ne.s32.totalorder %s45, %s46
      %p60 = scmp.eq.s32.totalorder %s26, 5
      %p61 = por %p59, %p60
      %p63 = scmp.ne.s32.totalorder %s46, %s62
      %p64 = scmp.eq.s32.totalorder %s26, 0
      %p65 = por %p63, %p64
      %s66 = ssub.s32 %s28, %s35
      %p67 = scmp.eq.s32.totalorder %s66, 0
      %s69 = sadd.s32 %s68, 1
      %s70 = scalar_select %p67, %s68, %s69
      %p73 = pneg %p67
      %p74 = scmp.eq.s32.totalorder %s20, 5
      %p75 = por %p73, %p74
      %p76 = scmp.ne.s32.totalorder %s68, %s71
      %p77 = scmp.eq.s32.totalorder %s20, 0
      %p78 = por %p76, %p77
      %p79 = scmp.ne.s32.totalorder %s68, %s71
      %p80 = scmp.eq.s32.totalorder %s25, 5
      %p81 = por %p79, %p80
      %p82 = scmp.ne.s32.totalorder %s71, %s72
      %p83 = scmp.eq.s32.totalorder %s25, 0
      %p84 = por %p82, %p83
      %p85 = scmp.ne.s32.totalorder %s71, %s72
      %p86 = scmp.eq.s32.totalorder %s26, 5
      %p87 = por %p85, %p86
      %p89 = scmp.ne.s32.totalorder %s72, %s88
      %p90 = scmp.eq.s32.totalorder %s26, 0
      %p91 = por %p89, %p90
      %s92 = ssub.s32 %s28, %s35
      %p93 = scmp.eq.s32.totalorder %s92, 0
      %s95 = sadd.s32 %s94, 1
      %s96 = scalar_select %p93, %s94, %s95
      %p99 = pneg %p93
      %p100 = scmp.eq.s32.totalorder %s20, 5
      %p101 = por %p99, %p100
      %p102 = scmp.ne.s32.totalorder %s94, %s97
      %p103 = scmp.eq.s32.totalorder %s20, 0
      %p104 = por %p102, %p103
      %p105 = scmp.ne.s32.totalorder %s94, %s97
      %p106 = scmp.eq.s32.totalorder %s25, 5
      %p107 = por %p105, %p106
      %p108 = scmp.ne.s32.totalorder %s97, %s98
      %p109 = scmp.eq.s32.totalorder %s25, 0
      %p110 = por %p108, %p109
      %p111 = scmp.ne.s32.totalorder %s97, %s98
      %p112 = scmp.eq.s32.totalorder %s26, 5
      %p113 = por %p111, %p112
      %p115 = scmp.ne.s32.totalorder %s98, %s114
      %p116 = scmp.eq.s32.totalorder %s26, 0
      %p117 = por %p115, %p116
      %s118 = ssub.s32 %s28, %s35
      %p119 = scmp.eq.s32.totalorder %s118, 0
      %s121 = sadd.s32 %s120, 1
      %s122 = scalar_select %p119, %s120, %s121
      %p125 = pneg %p119
      %p126 = scmp.eq.s32.totalorder %s20, 5
      %p127 = por %p125, %p126
      %p128 = scmp.ne.s32.totalorder %s120, %s123
      %p129 = scmp.eq.s32.totalorder %s20, 0
      %p130 = por %p128, %p129
      %p131 = scmp.ne.s32.totalorder %s120, %s123
      %p132 = scmp.eq.s32.totalorder %s25, 5
      %p133 = por %p131, %p132
      %p134 = scmp.ne.s32.totalorder %s123, %s124
      %p135 = scmp.eq.s32.totalorder %s25, 0
      %p136 = por %p134, %p135
      %p137 = scmp.ne.s32.totalorder %s123, %s124
      %p138 = scmp.eq.s32.totalorder %s26, 5
      %p139 = por %p137, %p138
      %p141 = scmp.ne.s32.totalorder %s124, %s140
      %p142 = scmp.eq.s32.totalorder %s26, 0
      %p143 = por %p141, %p142
      %s145 = sadd.s32 %s144, 1
      %p148 = scmp.eq.s32.totalorder %s20, 5
      %p149 = scmp.ne.s32.totalorder %s144, %s146
      %p150 = scmp.eq.s32.totalorder %s20, 0
      %p151 = por %p149, %p150
      %p152 = scmp.ne.s32.totalorder %s144, %s146
      %p153 = scmp.eq.s32.totalorder %s25, 5
      %p154 = por %p152, %p153
      %p155 = scmp.ne.s32.totalorder %s146, %s147
      %p156 = scmp.eq.s32.totalorder %s25, 0
      %p157 = por %p155, %p156
      %p158 = scmp.ne.s32.totalorder %s146, %s147
      %p159 = scmp.eq.s32.totalorder %s26, 5
      %p160 = por %p158, %p159
      %p162 = scmp.ne.s32.totalorder %s147, %s161
      %p163 = scmp.eq.s32.totalorder %s26, 0
      %p164 = por %p162, %p163
      %s165 = ssub.s32 %s27, %s39
      %p166 = scmp.eq.s32.totalorder %s165, 0
      %s168 = sadd.s32 %s167, 1
      %s169 = scalar_select %p166, %s167, %s168
      %p172 = pneg %p166
      %p173 = scmp.eq.s32.totalorder %s20, 5
      %p174 = por %p172, %p173
      %p175 = scmp.ne.s32.totalorder %s167, %s170
      %p176 = scmp.eq.s32.totalorder %s20, 0
      %p177 = por %p175, %p176
      %p178 = scmp.ne.s32.totalorder %s167, %s170
      %p179 = scmp.eq.s32.totalorder %s25, 5
      %p180 = por %p178, %p179
      %p181 = scmp.ne.s32.totalorder %s170, %s171
      %p182 = scmp.eq.s32.totalorder %s25, 0
      %p183 = por %p181, %p182
      %p184 = scmp.ne.s32.totalorder %s170, %s171
      %p185 = scmp.eq.s32.totalorder %s26, 5
      %p186 = por %p184, %p185
      %p188 = scmp.ne.s32.totalorder %s171, %s187
      %p189 = scmp.eq.s32.totalorder %s26, 0
      %p190 = por %p188, %p189
      %p191 = scmp.le.s32.totalorder 1, %s20
      %p192 = scmp.lt.s32.totalorder %s20, 7
      %p193 = pnand %p191, %p192
      %p194 = pneg %p193
      // Predicated region
      $region9: #{tpu_custom_call.1} parent=5 // pred_check
        _
      $region10: #{tpu_custom_call.1} parent=5 // pred_check_branch
        %196 = sbr.rel (%p193) target = $region12
      $region11: #{tpu_custom_call.1} parent=5 // pred_region
        %s197 = ssub.s32 %s20, 1
        // Predicated region
        $region13: #{tpu_custom_call.1} parent=11 // pred_check
          %p198 = pneg %p157
        $region14: #{tpu_custom_call.1} parent=11 // pred_check_branch
          %200 = sbr.rel (%p198) target = $region16
        $region15: #{tpu_custom_call.1} parent=11 // pred_region
          _
        $region16: #{tpu_custom_call.1} parent=11 // pred_fallthru
          _
      $region12: #{tpu_custom_call.1} parent=5 // pred_fallthru
        _
      %p201 = scmp.lt.s32.totalorder %s20, 6
      // Predicated region
      $region17: #{tpu_custom_call.1} parent=5 // pred_check
        %p202 = pneg %p201
      $region18: #{tpu_custom_call.1} parent=5 // pred_check_branch
        %204 = sbr.rel (%p202) target = $region20
      $region19: #{tpu_custom_call.1} parent=5 // pred_region
        // Predicated region
        $region21: #{tpu_custom_call.1} parent=19 // pred_check
          %p205 = pneg %p52
        $region22: #{tpu_custom_call.1} parent=19 // pred_check_branch
          %207 = sbr.rel (%p205) target = $region24
        $region23: #{tpu_custom_call.1} parent=19 // pred_region
          %s208 = sand.u32 %s42, 1
          %s209 = scalar_lea.sflag [#allocation4], %s208
          %s210 = sand.u32 %s42, 1
          %s211 = smul.addr %s210, 32
          %s212 = scalar_lea.vmem [#allocation3], %s211
          %s213 = smul.u32 4, %s27
          %s215 = ssub.s32 512, 512
          %216 = vsyncadd %s209, %s215
          %s217 = smul.addr %s213, 128
          %s218 = scalar_lea.hbm %s0, %s217
          %s219 = sshll.u32 %s212, 4
          %s220 = int_to_ptr.vmem [resolvable:$true] %s219
          %225 = dma.hbm_to_vmem [thread:$0]  %s218, 512, %s220, %s209, 128, 128, 8
        $region24: #{tpu_custom_call.1} parent=19 // pred_fallthru
          _
        // Predicated region
        $region25: #{tpu_custom_call.1} parent=19 // pred_check
          %p226 = pneg %p78
        $region26: #{tpu_custom_call.1} parent=19 // pred_check_branch
          %228 = sbr.rel (%p226) target = $region28
        $region27: #{tpu_custom_call.1} parent=19 // pred_region
          %s229 = sand.u32 %s20, 1
          %s230 = scalar_lea.sflag [#allocation7], %s229
          %s231 = sand.u32 %s68, 1
          %s232 = smul.addr %s231, 128
          %s233 = scalar_lea.vmem [#allocation6], %s232
          %s235 = ssub.s32 2048, 2048
          %236 = vsyncadd %s230, %s235
          %s237 = smul.addr %s28, 128
          %s238 = scalar_lea.hbm %s1, %s237
          %s239 = sshll.u32 %s233, 4
          %s240 = int_to_ptr.vmem [resolvable:$true] %s239
          %245 = dma.hbm_to_vmem [thread:$0]  %s238, 2048, %s240, %s230, 384, 128, 8
        $region28: #{tpu_custom_call.1} parent=19 // pred_fallthru
          _
        // Predicated region
        $region29: #{tpu_custom_call.1} parent=19 // pred_check
          %p246 = pneg %p104
        $region30: #{tpu_custom_call.1} parent=19 // pred_check_branch
          %248 = sbr.rel (%p246) target = $region32
        $region31: #{tpu_custom_call.1} parent=19 // pred_region
          %p249 = scmp.lt.s32.totalorder %s28, 2
          %s250 = scalar_select %p249, %s28, 2
          %s251 = scalar_lea.vmem %s2, %s250
        $region32: #{tpu_custom_call.1} parent=19 // pred_fallthru
          _
        // Predicated region
        $region33: #{tpu_custom_call.1} parent=19 // pred_check
          %p252 = pneg %p130
        $region34: #{tpu_custom_call.1} parent=19 // pred_check_branch
          %254 = sbr.rel (%p252) target = $region36
        $region35: #{tpu_custom_call.1} parent=19 // pred_region
          %s255 = sand.u32 %s20, 1
          %s256 = scalar_lea.sflag [#allocation7], %s255
          %s257 = sand.u32 %s120, 1
          %s258 = smul.addr %s257, 128
          %s259 = scalar_lea.vmem [#allocation8], %s258
          %s260 = smul.u32 16, %s28
          %s262 = ssub.s32 2048, 2048
          %263 = vsyncadd %s256, %s262
          %s264 = smul.addr %s260, 128
          %s265 = scalar_lea.hbm %s3, %s264
          %s266 = sshll.u32 %s259, 4
          %s267 = int_to_ptr.vmem [resolvable:$true] %s266
          %272 = dma.hbm_to_vmem [thread:$0]  %s265, 2048, %s267, %s256, 128, 128, 8
        $region36: #{tpu_custom_call.1} parent=19 // pred_fallthru
          _
      $region20: #{tpu_custom_call.1} parent=5 // pred_fallthru
        _
      %p273 = scmp.le.s32.totalorder 1, %s20
      %p274 = scmp.lt.s32.totalorder %s20, 7
      %p275 = pnand %p273, %p274
      %p276 = pneg %p275
      // Predicated region
      $region37: #{tpu_custom_call.1} parent=5 // pred_check
        _
      $region38: #{tpu_custom_call.1} parent=5 // pred_check_branch
        %278 = sbr.rel (%p275) target = $region40
      $region39: #{tpu_custom_call.1} parent=5 // pred_region
        %s279 = ssub.s32 %s20, 1
        %s280 = sand.u32 %s45, 1
        %s281 = scalar_lea.sflag [#allocation4], %s280
        %s282 = sand.u32 %s45, 1
        %s283 = smul.addr %s282, 32
        %s284 = scalar_lea.vmem [#allocation3], %s283
        // Predicated region
        $region41: #{tpu_custom_call.1} parent=39 // pred_check
          %p285 = pneg %p58
        $region42: #{tpu_custom_call.1} parent=39 // pred_check_branch
          %287 = sbr.rel (%p285) target = $region44
        $region43: #{tpu_custom_call.1} parent=39 // pred_region
          %288 = dma.done %s281, 512
        $region44: #{tpu_custom_call.1} parent=39 // pred_fallthru
          _
        %s289 = sand.u32 %s25, 1
        %s290 = scalar_lea.sflag [#allocation7], %s289
        %s291 = sand.u32 %s71, 1
        %s292 = smul.addr %s291, 128
        %s293 = scalar_lea.vmem [#allocation6], %s292
        // Predicated region
        $region45: #{tpu_custom_call.1} parent=39 // pred_check
          %p294 = pneg %p84
        $region46: #{tpu_custom_call.1} parent=39 // pred_check_branch
          %296 = sbr.rel (%p294) target = $region48
        $region47: #{tpu_custom_call.1} parent=39 // pred_region
          %297 = dma.done %s290, 2048
        $region48: #{tpu_custom_call.1} parent=39 // pred_fallthru
          _
        %s298 = sand.u32 %s25, 1
        %s299 = scalar_lea.sflag [#allocation7], %s298
        %s300 = sand.u32 %s123, 1
        %s301 = smul.addr %s300, 128
        %s302 = scalar_lea.vmem [#allocation8], %s301
        // Predicated region
        $region49: #{tpu_custom_call.1} parent=39 // pred_check
          %p303 = pneg %p136
        $region50: #{tpu_custom_call.1} parent=39 // pred_check_branch
          %305 = sbr.rel (%p303) target = $region52
        $region51: #{tpu_custom_call.1} parent=39 // pred_region
          %306 = dma.done %s299, 2048
        $region52: #{tpu_custom_call.1} parent=39 // pred_fallthru
          _
        %s307 = sand.u32 %s45, 1
        %s308 = scalar_lea.sflag [#allocation4], %s307
        %s309 = sand.u32 %s45, 1
        %s310 = smul.addr %s309, 32
        %s311 = scalar_lea.vmem [#allocation3], %s310
        %p312 = pneg %p58
        %p313 = pneg %p55
        %s314 = sand.u32 %s25, 1
        %s315 = scalar_lea.sflag [#allocation7], %s314
        %s316 = sand.u32 %s71, 1
        %s317 = smul.addr %s316, 128
        %s318 = scalar_lea.vmem [#allocation6], %s317
        %p319 = pneg %p84
        %p320 = pneg %p81
        %p321 = scmp.lt.s32.totalorder %s30, 2
        %s322 = scalar_select %p321, %s30, 2
        %s323 = scalar_lea.vmem %s2, %s322
        %p324 = pneg %p110
        %p325 = pneg %p107
        %s326 = sand.u32 %s25, 1
        %s327 = scalar_lea.sflag [#allocation7], %s326
        %s328 = sand.u32 %s123, 1
        %s329 = smul.addr %s328, 128
        %s330 = scalar_lea.vmem [#allocation8], %s329
        %p331 = pneg %p136
        %p332 = pneg %p133
        %p333 = pneg %p157
        %p334 = pneg %p154
        %p335 = pneg %p183
        %p336 = pneg %p180
        %s337 = sand.u32 %s170, 1
        %s338 = scalar_lea.sflag [#allocation5], %s337
        %s339 = sand.u32 %s170, 1
        %s340 = smul.addr %s339, 32
        %s341 = scalar_lea.vmem [#allocation9], %s340
        %s342 = smul.u32 4, %s29
        %p343 = scmp.lt.s32.totalorder %s30, 2
        %s344 = scalar_select %p343, %s30, 2
        %s345 = scalar_lea.vmem %s2, %s344
        %s346 = smul.u32 16, %s30
        %s347 = smul.u32 4, %s29
        %p348 = scmp.eq.s32.totalorder %s30, 0
        // Predicated region
        $region53: #{tpu_custom_call.1} parent=39 // pred_check
          %p349 = pneg %p348
        $region54: #{tpu_custom_call.1} parent=39 // pred_check_branch
          %351 = sbr.rel (%p349) target = $region56
        $region55: #{tpu_custom_call.1} parent=39 // pred_region
          %352 = vst [vmem:[#allocation2] sm:$0xff] 0.0
          %353 = vst [vmem:[#allocation2 + $0x8] sm:$0xff] 0.0
          %354 = vst [vmem:[#allocation2 + $0x10] sm:$0xff] 0.0
          %355 = vst [vmem:[#allocation2 + $0x18] sm:$0xff] 0.0
        $region56: #{tpu_custom_call.1} parent=39 // pred_fallthru
          _
        %v356 = vld [vmem:[%s284] sm:$0xff]
        %v357 = vld [vmem:[%s284 + $0x8] sm:$0xff]
        %v358 = vld [vmem:[%s284 + $0x10] sm:$0xff]
        %v359 = vld [vmem:[%s284 + $0x18] sm:$0xff]
        %v360 = vld [vmem:[%s293] sm:$0xff]
        %v361 = vld [vmem:[%s293 + $0x8] sm:$0xff]
        %v362 = vld [vmem:[%s293 + $0x10] sm:$0xff]
        %v363 = vld [vmem:[%s293 + $0x18] sm:$0xff]
        %v364 = vld [vmem:[%s293 + $0x20] sm:$0xff]
        %v365 = vld [vmem:[%s293 + $0x28] sm:$0xff]
        %v366 = vld [vmem:[%s293 + $0x30] sm:$0xff]
        %v367 = vld [vmem:[%s293 + $0x38] sm:$0xff]
        %v368 = vld [vmem:[%s293 + $0x40] sm:$0xff]
        %v369 = vld [vmem:[%s293 + $0x48] sm:$0xff]
        %v370 = vld [vmem:[%s293 + $0x50] sm:$0xff]
        %v371 = vld [vmem:[%s293 + $0x58] sm:$0xff]
        %v372 = vld [vmem:[%s293 + $0x60] sm:$0xff]
        %v373 = vld [vmem:[%s293 + $0x68] sm:$0xff]
        %v374 = vld [vmem:[%s293 + $0x70] sm:$0xff]
        %v375 = vld [vmem:[%s293 + $0x78] sm:$0xff]
        %v376 = vld [vmem:[%s345] sm:$0x1]
        %v378 = vlaneseq
        %v379 = vshrl.u32 %v378, 7
        %v380 = vsub.s32 0, %v379
        %v381 = vrot.slane %v376, %v380
        %383 = vmatprep.subr.mxu0 0.0
        %384 = vmatpush1.msra.mxu0 %v375
        %385 = vmatprep.subr.mxu0 0.0
        %386 = vmatpush1.msra.mxu0 %v374
        %387 = vmatprep.subr.mxu0 0.0
        %388 = vmatpush1.msra.mxu0 %v373
        %389 = vmatprep.subr.mxu0 0.0
        %390 = vmatpush1.msra.mxu0 %v372
        %391 = vmatprep.subr.mxu0 0.0
        %392 = vmatpush1.msra.mxu0 %v371
        %393 = vmatprep.subr.mxu0 0.0
        %394 = vmatpush1.msra.mxu0 %v370
        %395 = vmatprep.subr.mxu0 0.0
        %396 = vmatpush1.msra.mxu0 %v369
        %397 = vmatprep.subr.mxu0 0.0
        %398 = vmatpush1.msra.mxu0 %v368
        %399 = vmatprep.subr.mxu0 0.0
        %400 = vmatpush1.msra.mxu0 %v367
        %401 = vmatprep.subr.mxu0 0.0
        %402 = vmatpush1.msra.mxu0 %v366
        %403 = vmatprep.subr.mxu0 0.0
        %404 = vmatpush1.msra.mxu0 %v365
        %405 = vmatprep.subr.mxu0 0.0
        %406 = vmatpush1.msra.mxu0 %v364
        %407 = vmatprep.subr.mxu0 0.0
        %408 = vmatpush1.msra.mxu0 %v363
        %409 = vmatprep.subr.mxu0 0.0
        %410 = vmatpush1.msra.mxu0 %v362
        %411 = vmatprep.subr.mxu0 0.0
        %412 = vmatpush1.msra.mxu0 %v361
        %413 = vmatprep.subr.mxu0 0.0
        %414 = vmatpush1.msra.mxu0 %v360
        %415 = vmatprep.subr.mxu0 0.0
        %416 = vmatpush2.msra.mxu0 0.0
        %417 = vmatprep.subr.mxu0 0.0
        %418 = vmatpush2.msra.mxu0 0.0
        %419 = vmatprep.subr.mxu0 0.0
        %420 = vmatpush2.msra.mxu0 0.0
        %421 = vmatprep.subr.mxu0 0.0
        %422 = vmatpush2.msra.mxu0 0.0
        %423 = vmatprep.subr.mxu0 0.0
        %424 = vmatpush2.msra.mxu0 0.0
        %425 = vmatprep.subr.mxu0 0.0
        %426 = vmatpush2.msra.mxu0 0.0
        %427 = vmatprep.subr.mxu0 0.0
        %428 = vmatpush2.msra.mxu0 0.0
        %429 = vmatprep.subr.mxu0 0.0
        %430 = vmatpush2.msra.mxu0 0.0
        %431 = vmatprep.subr.mxu0 0.0
        %432 = vmatpush2.msra.mxu0 0.0
        %433 = vmatprep.subr.mxu0 0.0
        %434 = vmatpush2.msra.mxu0 0.0
        %435 = vmatprep.subr.mxu0 0.0
        %436 = vmatpush2.msra.mxu0 0.0
        %437 = vmatprep.subr.mxu0 0.0
        %438 = vmatpush2.msra.mxu0 0.0
        %439 = vmatprep.subr.mxu0 0.0
        %440 = vmatpush2.msra.mxu0 0.0
        %441 = vmatprep.subr.mxu0 0.0
        %442 = vmatpush2.msra.mxu0 0.0
        %443 = vmatprep.subr.mxu0 0.0
        %444 = vmatpush2.msra.mxu0 0.0
        %445 = vmatprep.subr.mxu0 0.0
        %446 = vmatpush2.msra.mxu0 0.0
        %447 = vmatprep.mubr.f32.mxu0 0.0
        %448 = vmatmul.mubr.f32.gmra.mxu0 %v356
        %v449 = vpop.f32.mrf.mxu0
        %v450 = vadd.f32 %v381, %v449
        %v451 = vpop.f32.mrf.mxu0
        %452 = vmatprep.mubr.f32.mxu0 0.0
        %453 = vmatmul.mubr.f32.gmra.mxu0 %v357
        %v454 = vpop.f32.mrf.mxu0
        %v455 = vadd.f32 %v381, %v454
        %v456 = vpop.f32.mrf.mxu0
        %457 = vmatprep.mubr.f32.mxu0 0.0
        %458 = vmatmul.mubr.f32.gmra.mxu0 %v358
        %v459 = vpop.f32.mrf.mxu0
        %v460 = vadd.f32 %v381, %v459
        %v461 = vpop.f32.mrf.mxu0
        %462 = vmatprep.mubr.f32.mxu0 0.0
        %463 = vmatmul.mubr.f32.gmra.mxu0 %v359
        %v464 = vpop.f32.mrf.mxu0
        %v465 = vadd.f32 %v381, %v464
        %v466 = vpop.f32.mrf.mxu0
        %467 = vdwg.mxu0
        %v468 = vmax.f32 %v450, 0.0
        %v469 = vmax.f32 %v455, 0.0
        %v470 = vmax.f32 %v460, 0.0
        %v471 = vmax.f32 %v465, 0.0
        %v472 = vld [vmem:[#allocation2] sm:$0xff]
        %v473 = vld [vmem:[#allocation2 + $0x8] sm:$0xff]
        %v474 = vld [vmem:[#allocation2 + $0x10] sm:$0xff]
        %v475 = vld [vmem:[#allocation2 + $0x18] sm:$0xff]
        %v476 = vld [vmem:[%s302] sm:$0xff]
        %v477 = vld [vmem:[%s302 + $0x8] sm:$0xff]
        %v478 = vld [vmem:[%s302 + $0x10] sm:$0xff]
        %v479 = vld [vmem:[%s302 + $0x18] sm:$0xff]
        %v480 = vld [vmem:[%s302 + $0x20] sm:$0xff]
        %v481 = vld [vmem:[%s302 + $0x28] sm:$0xff]
        %v482 = vld [vmem:[%s302 + $0x30] sm:$0xff]
        %v483 = vld [vmem:[%s302 + $0x38] sm:$0xff]
        %v484 = vld [vmem:[%s302 + $0x40] sm:$0xff]
        %v485 = vld [vmem:[%s302 + $0x48] sm:$0xff]
        %v486 = vld [vmem:[%s302 + $0x50] sm:$0xff]
        %v487 = vld [vmem:[%s302 + $0x58] sm:$0xff]
        %v488 = vld [vmem:[%s302 + $0x60] sm:$0xff]
        %v489 = vld [vmem:[%s302 + $0x68] sm:$0xff]
        %v490 = vld [vmem:[%s302 + $0x70] sm:$0xff]
        %v491 = vld [vmem:[%s302 + $0x78] sm:$0xff]
        %492 = vmatprep.subr.mxu0 0.0
        %493 = vmatpush1.msra.mxu0 %v491
        %494 = vmatprep.subr.mxu0 0.0
        %495 = vmatpush1.msra.mxu0 %v490
        %496 = vmatprep.subr.mxu0 0.0
        %497 = vmatpush1.msra.mxu0 %v489
        %498 = vmatprep.subr.mxu0 0.0
        %499 = vmatpush1.msra.mxu0 %v488
        %500 = vmatprep.subr.mxu0 0.0
        %501 = vmatpush1.msra.mxu0 %v487
        %502 = vmatprep.subr.mxu0 0.0
        %503 = vmatpush1.msra.mxu0 %v486
        %504 = vmatprep.subr.mxu0 0.0
        %505 = vmatpush1.msra.mxu0 %v485
        %506 = vmatprep.subr.mxu0 0.0
        %507 = vmatpush1.msra.mxu0 %v484
        %508 = vmatprep.subr.mxu0 0.0
        %509 = vmatpush1.msra.mxu0 %v483
        %510 = vmatprep.subr.mxu0 0.0
        %511 = vmatpush1.msra.mxu0 %v482
        %512 = vmatprep.subr.mxu0 0.0
        %513 = vmatpush1.msra.mxu0 %v481
        %514 = vmatprep.subr.mxu0 0.0
        %515 = vmatpush1.msra.mxu0 %v480
        %516 = vmatprep.subr.mxu0 0.0
        %517 = vmatpush1.msra.mxu0 %v479
        %518 = vmatprep.subr.mxu0 0.0
        %519 = vmatpush1.msra.mxu0 %v478
        %520 = vmatprep.subr.mxu0 0.0
        %521 = vmatpush1.msra.mxu0 %v477
        %522 = vmatprep.subr.mxu0 0.0
        %523 = vmatpush1.msra.mxu0 %v476
        %524 = vmatprep.subr.mxu0 0.0
        %525 = vmatpush2.msra.mxu0 0.0
        %526 = vmatprep.subr.mxu0 0.0
        %527 = vmatpush2.msra.mxu0 0.0
        %528 = vmatprep.subr.mxu0 0.0
        %529 = vmatpush2.msra.mxu0 0.0
        %530 = vmatprep.subr.mxu0 0.0
        %531 = vmatpush2.msra.mxu0 0.0
        %532 = vmatprep.subr.mxu0 0.0
        %533 = vmatpush2.msra.mxu0 0.0
        %534 = vmatprep.subr.mxu0 0.0
        %535 = vmatpush2.msra.mxu0 0.0
        %536 = vmatprep.subr.mxu0 0.0
        %537 = vmatpush2.msra.mxu0 0.0
        %538 = vmatprep.subr.mxu0 0.0
        %539 = vmatpush2.msra.mxu0 0.0
        %540 = vmatprep.subr.mxu0 0.0
        %541 = vmatpush2.msra.mxu0 0.0
        %542 = vmatprep.subr.mxu0 0.0
        %543 = vmatpush2.msra.mxu0 0.0
        %544 = vmatprep.subr.mxu0 0.0
        %545 = vmatpush2.msra.mxu0 0.0
        %546 = vmatprep.subr.mxu0 0.0
        %547 = vmatpush2.msra.mxu0 0.0
        %548 = vmatprep.subr.mxu0 0.0
        %549 = vmatpush2.msra.mxu0 0.0
        %550 = vmatprep.subr.mxu0 0.0
        %551 = vmatpush2.msra.mxu0 0.0
        %552 = vmatprep.subr.mxu0 0.0
        %553 = vmatpush2.msra.mxu0 0.0
        %554 = vmatprep.subr.mxu0 0.0
        %555 = vmatpush2.msra.mxu0 0.0
        %556 = vmatprep.mubr.f32.mxu0 0.0
        %557 = vmatmul.mubr.f32.gmra.mxu0 %v468
        %v558 = vpop.f32.mrf.mxu0
        %v559 = vadd.f32 0.0, %v558
        %v560 = vpop.f32.mrf.mxu0
        %561 = vmatprep.mubr.f32.mxu0 0.0
        %562 = vmatmul.mubr.f32.gmra.mxu0 %v469
        %v563 = vpop.f32.mrf.mxu0
        %v564 = vadd.f32 0.0, %v563
        %v565 = vpop.f32.mrf.mxu0
        %566 = vmatprep.mubr.f32.mxu0 0.0
        %567 = vmatmul.mubr.f32.gmra.mxu0 %v470
        %v568 = vpop.f32.mrf.mxu0
        %v569 = vadd.f32 0.0, %v568
        %v570 = vpop.f32.mrf.mxu0
        %571 = vmatprep.mubr.f32.mxu0 0.0
        %572 = vmatmul.mubr.f32.gmra.mxu0 %v471
        %v573 = vpop.f32.mrf.mxu0
        %v574 = vadd.f32 0.0, %v573
        %v575 = vpop.f32.mrf.mxu0
        %576 = vdwg.mxu0
        %v577 = vadd.f32 %v472, %v559
        %v578 = vadd.f32 %v473, %v564
        %v579 = vadd.f32 %v474, %v569
        %v580 = vadd.f32 %v475, %v574
        %581 = vst [vmem:[#allocation2] sm:$0xff] %v577
        %582 = vst [vmem:[#allocation2 + $0x8] sm:$0xff] %v578
        %583 = vst [vmem:[#allocation2 + $0x10] sm:$0xff] %v579
        %584 = vst [vmem:[#allocation2 + $0x18] sm:$0xff] %v580
        %p585 = scmp.eq.s32.totalorder %s30, 2
        // Predicated region
        $region57: #{tpu_custom_call.1} parent=39 // pred_check
          %p586 = pneg %p585
        $region58: #{tpu_custom_call.1} parent=39 // pred_check_branch
          %588 = sbr.rel (%p586) target = $region60
        $region59: #{tpu_custom_call.1} parent=39 // pred_region
          %v589 = vld [vmem:[#allocation2] sm:$0xff]
          %v590 = vld [vmem:[#allocation2 + $0x8] sm:$0xff]
          %v591 = vld [vmem:[#allocation2 + $0x10] sm:$0xff]
          %v592 = vld [vmem:[#allocation2 + $0x18] sm:$0xff]
          %v593 = vld [vmem:[%s4] sm:$0x1]
          %v595 = vlaneseq
          %v596 = vshrl.u32 %v595, 7
          %v597 = vsub.s32 0, %v596
          %v598 = vrot.slane %v593, %v597
          %v600 = vadd.f32 %v589, %v598
          %v601 = vadd.f32 %v590, %v598
          %v602 = vadd.f32 %v591, %v598
          %v603 = vadd.f32 %v592, %v598
          %604 = vst [vmem:[%s341] sm:$0xff] %v600
          %605 = vst [vmem:[%s341 + $0x8] sm:$0xff] %v601
          %606 = vst [vmem:[%s341 + $0x10] sm:$0xff] %v602
          %607 = vst [vmem:[%s341 + $0x18] sm:$0xff] %v603
        $region60: #{tpu_custom_call.1} parent=39 // pred_fallthru
          _
        %s608 = sand.u32 %s170, 1
        %s609 = scalar_lea.sflag [#allocation5], %s608
        %s610 = sand.u32 %s170, 1
        %s611 = smul.addr %s610, 32
        %s612 = scalar_lea.vmem [#allocation9], %s611
        // Predicated region
        $region61: #{tpu_custom_call.1} parent=39 // pred_check
          %p613 = pneg %p180
        $region62: #{tpu_custom_call.1} parent=39 // pred_check_branch
          %615 = sbr.rel (%p613) target = $region64
        $region63: #{tpu_custom_call.1} parent=39 // pred_region
          %s616 = smul.u32 4, %s29
          %s618 = ssub.s32 512, 512
          %619 = vsyncadd %s609, %s618
          %s620 = smul.addr %s616, 128
          %s621 = scalar_lea.hbm %s5, %s620
          %s622 = sshll.u32 %s612, 4
          %s623 = int_to_ptr.vmem [resolvable:$true] %s622
          %628 = dma.vmem_to_hbm [thread:$0]  %s623, 512, %s621, %s609, 128, 128, 8
        $region64: #{tpu_custom_call.1} parent=39 // pred_fallthru
          _
      $region40: #{tpu_custom_call.1} parent=5 // pred_fallthru
        _
      %p629 = scmp.le.s32.totalorder 2, %s20
      // Predicated region
      $region65: #{tpu_custom_call.1} parent=5 // pred_check
        %p630 = pneg %p629
      $region66: #{tpu_custom_call.1} parent=5 // pred_check_branch
        %632 = sbr.rel (%p630) target = $region68
      $region67: #{tpu_custom_call.1} parent=5 // pred_region
        %s633 = ssub.s32 %s20, 2
        // Predicated region
        $region69: #{tpu_custom_call.1} parent=67 // pred_check
          %p634 = pneg %p186
        $region70: #{tpu_custom_call.1} parent=67 // pred_check_branch
          %636 = sbr.rel (%p634) target = $region72
        $region71: #{tpu_custom_call.1} parent=67 // pred_region
          %s637 = sand.u32 %s171, 1
          %s638 = scalar_lea.sflag [#allocation5], %s637
          %s639 = sand.u32 %s171, 1
          %s640 = smul.addr %s639, 32
          %s641 = scalar_lea.vmem [#allocation9], %s640
          %642 = dma.done %s638, 512
        $region72: #{tpu_custom_call.1} parent=67 // pred_fallthru
          _
      $region68: #{tpu_custom_call.1} parent=5 // pred_fallthru
        _
    $region6: #{tpu_custom_call.1} parent=1 // loop_footer
      %s24 = sadd.s32 1, %s20
    $region7: #{tpu_custom_call.1} parent=1 // loop_footer_branch
      %19 = sbr.rel target = $region3
    $region8: #{tpu_custom_call.1} parent=1 // loop_exit
      _
    %643 = vsyncpa [#allocation4], 1
    %s644 = scalar_lea.sflag [#allocation4], 1
    %645 = vsyncpa %s644, 1
    %646 = vsyncpa [#allocation7], 1
    %s647 = scalar_lea.sflag [#allocation7], 1
    %648 = vsyncpa %s647, 1
    %649 = vsyncpa [#allocation5], 1
    %s650 = scalar_lea.sflag [#allocation5], 1
    %651 = vsyncpa %s650, 1

</llo_original>
